<compile_context>
chip_gen: v7x
topology: tpu7x:2x2x1
jax: 0.10.0
libtpu: 0.0.40
codegen_flags: <defaults>
</compile_context>

<pallas_src>
import jax
import jax.numpy as jnp
from jax.experimental import pallas as pl
from jax.experimental.pallas import tpu as pltpu

LANE = 128
LN_EPS = 1e-5
# Single-buffered weight bytes allowed resident per pallas_call ("group").
# Conservative for v7x's 64 MiB/TC VMEM (leaves headroom for activations).
_WEIGHT_VMEM_BUDGET = 40 << 20


def _round_up(n: int, m: int) -> int:
    return ((n + m - 1) // m) * m


def _pad2d(a, rows: int, cols: int):
    r, c = a.shape
    return jnp.pad(a, ((0, rows - r), (0, cols - c)))


def _choose_tm(B: int) -> int:
    """Batch tile: multiple of 8, capped at 256 (v7x VMEM safety), and for
    moderate batches sized so the grid has >= 2 steps (megacore split)."""
    if B <= 8:
        return 8
    tm = _round_up((B + 1) // 2, 8)
    return min(tm, 256)


# -----------------------------------------------------------------------------
# Fused kernel for one layer group (layer count / real dims are static)
# -----------------------------------------------------------------------------
def _make_group_kernel(hidden_real, has_head):
    """hidden_real: real (unpadded) output widths of the blocks in this group;
    has_head: whether this group ends with the final plain Linear."""
    n_blocks = len(hidden_real)

    def kernel(x_ref, *refs):
        out_ref = refs[-1]
        h = x_ref[...]
        if h.dtype != jnp.float32:
            h = h.astype(jnp.float32)

        idx = 0
        for l in range(n_blocks):
            w = refs[idx][...]        # bf16, padded cols are zero
            b = refs[idx + 1][...]    # f32, padded lanes are zero
            g = refs[idx + 2][...]    # f32, padded lanes are zero
            beta = refs[idx + 3][...]  # f32, padded lanes are zero
            idx += 4

            # Linear on the MXU in bf16, f32 accumulate. Padded output lanes
            # of y are exactly 0 (zero weight cols, zero bias lanes).
            y = jnp.dot(h.astype(jnp.bfloat16), w,
                        preferred_element_type=jnp.float32) + b

            # LayerNorm over the REAL feature count (biased var, eps=1e-5,
            # matching PyTorch). Padded lanes contribute 0 to both sums, so
            # no lane mask is needed: var = E[y^2] - mean^2.
            inv_n = 1.0 / float(hidden_real[l])
            mean = jnp.sum(y, axis=-1, keepdims=True) * inv_n
            var = jnp.sum(y * y, axis=-1, keepdims=True) * inv_n - mean * mean
            var = jnp.maximum(var, 0.0)  # guard tiny negative from cancellation
            # Padded lanes: (0 - mean) * rsqrt * 0 + 0 = 0 -> stay zero.
            y_hat = (y - mean) * jax.lax.rsqrt(var + LN_EPS) * g + beta

            # ReLU; Dropout is identity at inference.
            h = jnp.maximum(y_hat, 0.0)

        if has_head:
            w = refs[idx][...]
            b = refs[idx + 1][...]
            h = jnp.dot(h.astype(jnp.bfloat16), w,
                        preferred_element_type=jnp.float32) + b

        out_ref[...] = h.astype(out_ref.dtype)

    return kernel


# -----------------------------------------------------------------------------
# PallasMLP: pads/casts weights once, builds jitted fused forward
# -----------------------------------------------------------------------------
class PallasMLP:
    def __init__(self, params):
        blocks = params["blocks"]
        w_h, b_h = params["head"]

        self.hidden_real = tuple(int(w.shape[1]) for (w, _, _, _) in blocks)
        self.in_real = int(blocks[0][0].shape[0]) if blocks else int(w_h.shape[0])
        self.out_real = int(w_h.shape[1])

        dims_real = (self.in_real,) + self.hidden_real
        self.dims_p = tuple(_round_up(d, LANE) for d in dims_real)
        self.out_p = _round_up(self.out_real, LANE)

        # ---- prepare step: pad + cast ONCE (outside the per-call path) ----
        self.block_params = []
        for l, (w, b, g, beta) in enumerate(blocks):
            dip, dop = self.dims_p[l], self.dims_p[l + 1]
            self.block_params.append((
                _pad2d(w, dip, dop).astype(jnp.bfloat16),
                _pad2d(b, 1, dop).astype(jnp.float32),
                _pad2d(g, 1, dop).astype(jnp.float32),   # padded gamma = 0 (invariant!)
                _pad2d(beta, 1, dop).astype(jnp.float32),  # padded beta = 0
            ))
        self.head_params = (
            _pad2d(w_h, self.dims_p[-1], self.out_p).astype(jnp.bfloat16),
            _pad2d(b_h, 1, self.out_p).astype(jnp.float32),
        )

        self.groups = self._build_groups()
        self._fwd = jax.jit(self._forward)

    # ---- group layers so each group's resident weights fit the VMEM budget
    def _build_groups(self):
        def arr_bytes(arrs):
            return sum(int(a.size) * a.dtype.itemsize for a in arrs)

        groups = []
        cur, cur_bytes = [], 0
        for l, bp in enumerate(self.block_params):
            nb = arr_bytes(bp)
            if cur and cur_bytes + nb > _WEIGHT_VMEM_BUDGET:
                groups.append({"blocks": cur, "has_head": False})
                cur, cur_bytes = [], 0
            cur.append(l)
            cur_bytes += nb
        hb = arr_bytes(self.head_params)
        if cur and cur_bytes + hb > _WEIGHT_VMEM_BUDGET:
            groups.append({"blocks": cur, "has_head": False})
            cur = []
        groups.append({"blocks": cur, "has_head": True})
        return groups

    def __call__(self, x):
        flat = []
        for bp in self.block_params:
            flat += list(bp)
        flat += list(self.head_params)
        return self._fwd(x, *flat)

    # ---- jitted forward: x + flat padded params -> output -----------------
    def _forward(self, x, *flat):
        B = x.shape[0]
        din_p = self.dims_p[0]
        tm = _choose_tm(B)
        b_pad = _round_up(B, tm)
        grid = (b_pad // tm,)

        # Pad batch/lanes; keep x's native dtype (cast once inside the kernel).
        h = jnp.pad(x, ((0, b_pad - B), (0, din_p - x.shape[1])))

        n_blocks_total = len(self.hidden_real)

        for gdef in self.groups:
            block_ids = gdef["blocks"]
            has_head = gdef["has_head"]
            hidden_real_g = tuple(self.hidden_real[l] for l in block_ids)
            din_g = self.dims_p[block_ids[0]] if block_ids else self.dims_p[-1]
            dout_g = self.out_p if has_head else self.dims_p[block_ids[-1] + 1]

            inputs = [h]
            in_specs = [pl.BlockSpec((tm, din_g), lambda i: (i, 0))]
            weight_bytes = 0

            for l in block_ids:
                dip, dop = self.dims_p[l], self.dims_p[l + 1]
                w, b, gm, bt = flat[4 * l: 4 * l + 4]
                inputs += [w, b, gm, bt]
                # Grid-invariant blocks: constant index_map + single buffering.
                in_specs += [
                    pl.BlockSpec((dip, dop), lambda i: (0, 0),
                                 pipeline_mode=pl.Buffered(1)),
                    pl.BlockSpec((1, dop), lambda i: (0, 0),
                                 pipeline_mode=pl.Buffered(1)),
                    pl.BlockSpec((1, dop), lambda i: (0, 0),
                                 pipeline_mode=pl.Buffered(1)),
                    pl.BlockSpec((1, dop), lambda i: (0, 0),
                                 pipeline_mode=pl.Buffered(1)),
                ]
                weight_bytes += dip * dop * 2 + 3 * dop * 4

            if has_head:
                w, b = flat[4 * n_blocks_total], flat[4 * n_blocks_total + 1]
                inputs += [w, b]
                dlast = self.dims_p[-1]
                in_specs += [
                    pl.BlockSpec((dlast, self.out_p), lambda i: (0, 0),
                                 pipeline_mode=pl.Buffered(1)),
                    pl.BlockSpec((1, self.out_p), lambda i: (0, 0),
                                 pipeline_mode=pl.Buffered(1)),
                ]
                weight_bytes += dlast * self.out_p * 2 + self.out_p * 4

            out_specs = pl.BlockSpec((tm, dout_g), lambda i: (i, 0))

            # Explicit scoped-VMEM limit: single-buffered weights +
            # double-buffered activations + ~4 live activation temporaries.
            dims_g = ([din_g] + [self.dims_p[l + 1] for l in block_ids]
                      + ([self.out_p] if has_head else []))
            max_d = max(dims_g)
            act_bytes = 2 * tm * din_g * h.dtype.itemsize + 2 * tm * dout_g * 4
            temp_bytes = 4 * tm * max_d * 4
            vmem_limit = int(weight_bytes + act_bytes + temp_bytes) + (8 << 20)
            vmem_limit = max(vmem_limit, 32 << 20)
            vmem_limit = min(vmem_limit, 100 << 20)

            flops = sum(2 * b_pad * a * c for a, c in zip(dims_g[:-1], dims_g[1:]))
            bytes_acc = (sum(int(a.size) * a.dtype.itemsize for a in inputs)
                         + b_pad * dout_g * 4)
            cost = pl.CostEstimate(flops=int(flops),
                                   transcendentals=int(b_pad * len(block_ids)),
                                   bytes_accessed=int(bytes_acc))

            kernel = _make_group_kernel(hidden_real_g, has_head)
            h = pl.pallas_call(
                kernel,
                out_shape=jax.ShapeDtypeStruct((b_pad, dout_g), jnp.float32),
                grid=grid,
                in_specs=in_specs,
                out_specs=out_specs,
                compiler_params=pltpu.CompilerParams(
                    dimension_semantics=("parallel",),
                    vmem_limit_bytes=vmem_limit,
                ),
                cost_estimate=cost,
            )(*inputs)

        return h[:B, :self.out_real]


# -----------------------------------------------------------------------------
# Parameter init (mimics PyTorch nn.Linear default uniform +-1/sqrt(fan_in))
# -----------------------------------------------------------------------------
def init_mlp_params(key, input_dim, output_dim, hidden_dims):
    dims = [input_dim] + list(hidden_dims)
    params = {"blocks": [], "head": None}
    for i in range(len(dims) - 1):
        din, dout = dims[i], dims[i + 1]
        key, kw, kb = jax.random.split(key, 3)
        bound = 1.0 / jnp.sqrt(din)
        w = jax.random.uniform(kw, (din, dout), jnp.float32, -bound, bound)
        b = jax.random.uniform(kb, (1, dout), jnp.float32, -bound, bound)
        gamma = jnp.ones((1, dout), jnp.float32)
        beta = jnp.zeros((1, dout), jnp.float32)
        params["blocks"].append((w, b, gamma, beta))
    din = dims[-1]
    key, kw, kb = jax.random.split(key, 3)
    bound = 1.0 / jnp.sqrt(din)
    w = jax.random.uniform(kw, (din, output_dim), jnp.float32, -bound, bound)
    b = jax.random.uniform(kb, (1, output_dim), jnp.float32, -bound, bound)
    params["head"] = (w, b)
    return params


def mlp_forward_ref(params, x, emulate_bf16_matmul=True):
    """Pure-JAX reference. With emulate_bf16_matmul=True the dot operands are
    rounded to bf16 (matching the MXU path the kernel uses)."""
    def mm(h, w):
        if emulate_bf16_matmul:
            h = h.astype(jnp.bfloat16).astype(jnp.float32)
            w = w.astype(jnp.bfloat16).astype(jnp.float32)
        return h @ w

    h = x
    for (w, b, gamma, beta) in params["blocks"]:
        y = mm(h, w) + b
        mean = jnp.mean(y, axis=-1, keepdims=True)
        var = jnp.mean((y - mean) ** 2, axis=-1, keepdims=True)
        y = (y - mean) / jnp.sqrt(var + LN_EPS) * gamma + beta
        h = jnp.maximum(y, 0.0)
    w, b = params["head"]
    return mm(h, w) + b


if __name__ == "__main__":
    key = jax.random.PRNGKey(0)
    kparam, kx = jax.random.split(key)

    batch = 8
    input_dim = 16
    hidden_dims = [32, 32]
    output_dim = 4
    # activation="relu", dropout_rate=0.1 (identity at inference)

    params = init_mlp_params(kparam, input_dim, output_dim, hidden_dims)
    x = jax.random.normal(kx, (batch, input_dim), jnp.float32)

    model = PallasMLP(params)
    out = model(x)
    jax.block_until_ready(out)

    ref = mlp_forward_ref(params, x, emulate_bf16_matmul=True)
    assert out.shape == (batch, output_dim)
    assert jnp.allclose(out, ref, atol=2e-3, rtol=2e-3), "mismatch vs reference"

    print("KERNEL_OK")
</pallas_src>

<mosaic_0001>
module attributes {stable_mosaic.version = 11 : i64} {
  func.func @kernel(%arg0: i32, %arg1: memref<8x128xf32, #tpu.memory_space<vmem>>, %arg2: memref<128x128xbf16, #tpu.memory_space<vmem>>, %arg3: memref<1x128xf32, #tpu.memory_space<vmem>>, %arg4: memref<1x128xf32, #tpu.memory_space<vmem>>, %arg5: memref<1x128xf32, #tpu.memory_space<vmem>>, %arg6: memref<128x128xbf16, #tpu.memory_space<vmem>>, %arg7: memref<1x128xf32, #tpu.memory_space<vmem>>, %arg8: memref<1x128xf32, #tpu.memory_space<vmem>>, %arg9: memref<1x128xf32, #tpu.memory_space<vmem>>, %arg10: memref<128x128xbf16, #tpu.memory_space<vmem>>, %arg11: memref<1x128xf32, #tpu.memory_space<vmem>>, %arg12: memref<8x128xf32, #tpu.memory_space<vmem>>) attributes {dimension_semantics = [#tpu.dimension_semantics<parallel>], iteration_bounds = array<i64: 1>, scalar_prefetch = 0 : i64, scratch_operands = 0 : i64, tpu.core_type = #tpu.core_type<tc>, window_params = [{transform_indices = @transform_0, window_bounds = array<i64: 8, 128>}, {pipeline_mode = #tpu.pipeline_mode<synchronous>, transform_indices = @transform_1, window_bounds = array<i64: 128, 128>}, {pipeline_mode = #tpu.pipeline_mode<synchronous>, transform_indices = @transform_2, window_bounds = array<i64: 1, 128>}, {pipeline_mode = #tpu.pipeline_mode<synchronous>, transform_indices = @transform_3, window_bounds = array<i64: 1, 128>}, {pipeline_mode = #tpu.pipeline_mode<synchronous>, transform_indices = @transform_4, window_bounds = array<i64: 1, 128>}, {pipeline_mode = #tpu.pipeline_mode<synchronous>, transform_indices = @transform_5, window_bounds = array<i64: 128, 128>}, {pipeline_mode = #tpu.pipeline_mode<synchronous>, transform_indices = @transform_6, window_bounds = array<i64: 1, 128>}, {pipeline_mode = #tpu.pipeline_mode<synchronous>, transform_indices = @transform_7, window_bounds = array<i64: 1, 128>}, {pipeline_mode = #tpu.pipeline_mode<synchronous>, transform_indices = @transform_8, window_bounds = array<i64: 1, 128>}, {pipeline_mode = #tpu.pipeline_mode<synchronous>, transform_indices = @transform_9, window_bounds = array<i64: 128, 128>}, {pipeline_mode = #tpu.pipeline_mode<synchronous>, transform_indices = @transform_10, window_bounds = array<i64: 1, 128>}, {transform_indices = @transform_11, window_bounds = array<i64: 8, 128>}]} {
    %c0 = arith.constant 0 : index
    %c0_0 = arith.constant 0 : index
    %0 = vector.load %arg1[%c0, %c0_0] : memref<8x128xf32, #tpu.memory_space<vmem>>, vector<8x128xf32>
    %c0_1 = arith.constant 0 : index
    %c0_2 = arith.constant 0 : index
    %1 = vector.load %arg2[%c0_1, %c0_2] : memref<128x128xbf16, #tpu.memory_space<vmem>>, vector<128x128xbf16>
    %c0_3 = arith.constant 0 : index
    %c0_4 = arith.constant 0 : index
    %2 = vector.load %arg3[%c0_3, %c0_4] : memref<1x128xf32, #tpu.memory_space<vmem>>, vector<1x128xf32>
    %c0_5 = arith.constant 0 : index
    %c0_6 = arith.constant 0 : index
    %3 = vector.load %arg4[%c0_5, %c0_6] : memref<1x128xf32, #tpu.memory_space<vmem>>, vector<1x128xf32>
    %c0_7 = arith.constant 0 : index
    %c0_8 = arith.constant 0 : index
    %4 = vector.load %arg5[%c0_7, %c0_8] : memref<1x128xf32, #tpu.memory_space<vmem>>, vector<1x128xf32>
    %5 = arith.truncf %0 : vector<8x128xf32> to vector<8x128xbf16>
    %cst = arith.constant dense<0.000000e+00> : vector<8x128xf32>
    %6 = tpu.matmul %5, %1, %cst {dimension_numbers = #tpu.dot_dimension_numbers<[1], [0], [0], [1], [0, 0, 1, 1], [], []>} : vector<8x128xbf16>, vector<128x128xbf16>, vector<8x128xf32> -> vector<8x128xf32>
    %7 = vector.broadcast %2 : vector<1x128xf32> to vector<8x128xf32>
    %8 = arith.addf %6, %7 : vector<8x128xf32>
    %cst_9 = arith.constant dense<0.000000e+00> : vector<8xf32>
    %9 = vector.multi_reduction <add>, %8, %cst_9 [1] : vector<8x128xf32> to vector<8xf32>
    %10 = vector.shape_cast %9 : vector<8xf32> to vector<8x1xf32>
    %cst_10 = arith.constant 3.125000e-02 : f32
    %11 = vector.broadcast %cst_10 : f32 to vector<8x1xf32>
    %12 = arith.mulf %10, %11 : vector<8x1xf32>
    %13 = arith.mulf %8, %8 : vector<8x128xf32>
    %cst_11 = arith.constant dense<0.000000e+00> : vector<8xf32>
    %14 = vector.multi_reduction <add>, %13, %cst_11 [1] : vector<8x128xf32> to vector<8xf32>
    %15 = vector.shape_cast %14 : vector<8xf32> to vector<8x1xf32>
    %cst_12 = arith.constant 3.125000e-02 : f32
    %16 = vector.broadcast %cst_12 : f32 to vector<8x1xf32>
    %17 = arith.mulf %15, %16 : vector<8x1xf32>
    %18 = arith.mulf %12, %12 : vector<8x1xf32>
    %19 = arith.subf %17, %18 : vector<8x1xf32>
    %cst_13 = arith.constant 0.000000e+00 : f32
    %20 = vector.broadcast %cst_13 : f32 to vector<8x1xf32>
    %21 = arith.maximumf %19, %20 : vector<8x1xf32>
    %22 = vector.broadcast %12 : vector<8x1xf32> to vector<8x128xf32>
    %23 = arith.subf %8, %22 : vector<8x128xf32>
    %cst_14 = arith.constant 9.99999974E-6 : f32
    %24 = vector.broadcast %cst_14 : f32 to vector<8x1xf32>
    %25 = arith.addf %21, %24 : vector<8x1xf32>
    %26 = math.rsqrt %25 : vector<8x1xf32>
    %27 = vector.broadcast %26 : vector<8x1xf32> to vector<8x128xf32>
    %28 = arith.mulf %23, %27 : vector<8x128xf32>
    %29 = vector.broadcast %3 : vector<1x128xf32> to vector<8x128xf32>
    %30 = arith.mulf %28, %29 : vector<8x128xf32>
    %31 = vector.broadcast %4 : vector<1x128xf32> to vector<8x128xf32>
    %32 = arith.addf %30, %31 : vector<8x128xf32>
    %cst_15 = arith.constant 0.000000e+00 : f32
    %33 = vector.broadcast %cst_15 : f32 to vector<8x128xf32>
    %34 = arith.maximumf %32, %33 : vector<8x128xf32>
    %c0_16 = arith.constant 0 : index
    %c0_17 = arith.constant 0 : index
    %35 = vector.load %arg6[%c0_16, %c0_17] : memref<128x128xbf16, #tpu.memory_space<vmem>>, vector<128x128xbf16>
    %c0_18 = arith.constant 0 : index
    %c0_19 = arith.constant 0 : index
    %36 = vector.load %arg7[%c0_18, %c0_19] : memref<1x128xf32, #tpu.memory_space<vmem>>, vector<1x128xf32>
    %c0_20 = arith.constant 0 : index
    %c0_21 = arith.constant 0 : index
    %37 = vector.load %arg8[%c0_20, %c0_21] : memref<1x128xf32, #tpu.memory_space<vmem>>, vector<1x128xf32>
    %c0_22 = arith.constant 0 : index
    %c0_23 = arith.constant 0 : index
    %38 = vector.load %arg9[%c0_22, %c0_23] : memref<1x128xf32, #tpu.memory_space<vmem>>, vector<1x128xf32>
    %39 = arith.truncf %34 : vector<8x128xf32> to vector<8x128xbf16>
    %cst_24 = arith.constant dense<0.000000e+00> : vector<8x128xf32>
    %40 = tpu.matmul %39, %35, %cst_24 {dimension_numbers = #tpu.dot_dimension_numbers<[1], [0], [0], [1], [0, 0, 1, 1], [], []>} : vector<8x128xbf16>, vector<128x128xbf16>, vector<8x128xf32> -> vector<8x128xf32>
    %41 = vector.broadcast %36 : vector<1x128xf32> to vector<8x128xf32>
    %42 = arith.addf %40, %41 : vector<8x128xf32>
    %cst_25 = arith.constant dense<0.000000e+00> : vector<8xf32>
    %43 = vector.multi_reduction <add>, %42, %cst_25 [1] : vector<8x128xf32> to vector<8xf32>
    %44 = vector.shape_cast %43 : vector<8xf32> to vector<8x1xf32>
    %cst_26 = arith.constant 3.125000e-02 : f32
    %45 = vector.broadcast %cst_26 : f32 to vector<8x1xf32>
    %46 = arith.mulf %44, %45 : vector<8x1xf32>
    %47 = arith.mulf %42, %42 : vector<8x128xf32>
    %cst_27 = arith.constant dense<0.000000e+00> : vector<8xf32>
    %48 = vector.multi_reduction <add>, %47, %cst_27 [1] : vector<8x128xf32> to vector<8xf32>
    %49 = vector.shape_cast %48 : vector<8xf32> to vector<8x1xf32>
    %cst_28 = arith.constant 3.125000e-02 : f32
    %50 = vector.broadcast %cst_28 : f32 to vector<8x1xf32>
    %51 = arith.mulf %49, %50 : vector<8x1xf32>
    %52 = arith.mulf %46, %46 : vector<8x1xf32>
    %53 = arith.subf %51, %52 : vector<8x1xf32>
    %cst_29 = arith.constant 0.000000e+00 : f32
    %54 = vector.broadcast %cst_29 : f32 to vector<8x1xf32>
    %55 = arith.maximumf %53, %54 : vector<8x1xf32>
    %56 = vector.broadcast %46 : vector<8x1xf32> to vector<8x128xf32>
    %57 = arith.subf %42, %56 : vector<8x128xf32>
    %cst_30 = arith.constant 9.99999974E-6 : f32
    %58 = vector.broadcast %cst_30 : f32 to vector<8x1xf32>
    %59 = arith.addf %55, %58 : vector<8x1xf32>
    %60 = math.rsqrt %59 : vector<8x1xf32>
    %61 = vector.broadcast %60 : vector<8x1xf32> to vector<8x128xf32>
    %62 = arith.mulf %57, %61 : vector<8x128xf32>
    %63 = vector.broadcast %37 : vector<1x128xf32> to vector<8x128xf32>
    %64 = arith.mulf %62, %63 : vector<8x128xf32>
    %65 = vector.broadcast %38 : vector<1x128xf32> to vector<8x128xf32>
    %66 = arith.addf %64, %65 : vector<8x128xf32>
    %cst_31 = arith.constant 0.000000e+00 : f32
    %67 = vector.broadcast %cst_31 : f32 to vector<8x128xf32>
    %68 = arith.maximumf %66, %67 : vector<8x128xf32>
    %c0_32 = arith.constant 0 : index
    %c0_33 = arith.constant 0 : index
    %69 = vector.load %arg10[%c0_32, %c0_33] : memref<128x128xbf16, #tpu.memory_space<vmem>>, vector<128x128xbf16>
    %c0_34 = arith.constant 0 : index
    %c0_35 = arith.constant 0 : index
    %70 = vector.load %arg11[%c0_34, %c0_35] : memref<1x128xf32, #tpu.memory_space<vmem>>, vector<1x128xf32>
    %71 = arith.truncf %68 : vector<8x128xf32> to vector<8x128xbf16>
    %cst_36 = arith.constant dense<0.000000e+00> : vector<8x128xf32>
    %72 = tpu.matmul %71, %69, %cst_36 {dimension_numbers = #tpu.dot_dimension_numbers<[1], [0], [0], [1], [0, 0, 1, 1], [], []>} : vector<8x128xbf16>, vector<128x128xbf16>, vector<8x128xf32> -> vector<8x128xf32>
    %73 = vector.broadcast %70 : vector<1x128xf32> to vector<8x128xf32>
    %74 = arith.addf %72, %73 : vector<8x128xf32>
    %c0_37 = arith.constant 0 : index
    %c0_38 = arith.constant 0 : index
    %75 = vector.load %arg12[%c0_37, %c0_38] : memref<8x128xf32, #tpu.memory_space<vmem>>, vector<8x128xf32>
    tpu.vector_store %arg12[%c0_37, %c0_38], %74 {strides = array<i32>} : memref<8x128xf32, #tpu.memory_space<vmem>>, vector<8x128xf32>,
    return
  }
  func.func @transform_0(%arg0: i32) -> (i32, i32) {
    %c0_i32 = arith.constant 0 : i32
    %c0_i32_0 = arith.constant 0 : i32
    return %arg0, %c0_i32 : i32, i32
  }
  func.func @transform_1(%arg0: i32) -> (i32, i32) {
    %c0_i32 = arith.constant 0 : i32
    %c0_i32_0 = arith.constant 0 : i32
    %c0_i32_1 = arith.constant 0 : i32
    return %c0_i32, %c0_i32_0 : i32, i32
  }
  func.func @transform_2(%arg0: i32) -> (i32, i32) {
    %c0_i32 = arith.constant 0 : i32
    %c0_i32_0 = arith.constant 0 : i32
    %c0_i32_1 = arith.constant 0 : i32
    return %c0_i32, %c0_i32_0 : i32, i32
  }
  func.func @transform_3(%arg0: i32) -> (i32, i32) {
    %c0_i32 = arith.constant 0 : i32
    %c0_i32_0 = arith.constant 0 : i32
    %c0_i32_1 = arith.constant 0 : i32
    return %c0_i32, %c0_i32_0 : i32, i32
  }
  func.func @transform_4(%arg0: i32) -> (i32, i32) {
    %c0_i32 = arith.constant 0 : i32
    %c0_i32_0 = arith.constant 0 : i32
    %c0_i32_1 = arith.constant 0 : i32
    return %c0_i32, %c0_i32_0 : i32, i32
  }
  func.func @transform_5(%arg0: i32) -> (i32, i32) {
    %c0_i32 = arith.constant 0 : i32
    %c0_i32_0 = arith.constant 0 : i32
    %c0_i32_1 = arith.constant 0 : i32
    return %c0_i32, %c0_i32_0 : i32, i32
  }
  func.func @transform_6(%arg0: i32) -> (i32, i32) {
    %c0_i32 = arith.constant 0 : i32
    %c0_i32_0 = arith.constant 0 : i32
    %c0_i32_1 = arith.constant 0 : i32
    return %c0_i32, %c0_i32_0 : i32, i32
  }
  func.func @transform_7(%arg0: i32) -> (i32, i32) {
    %c0_i32 = arith.constant 0 : i32
    %c0_i32_0 = arith.constant 0 : i32
    %c0_i32_1 = arith.constant 0 : i32
    return %c0_i32, %c0_i32_0 : i32, i32
  }
  func.func @transform_8(%arg0: i32) -> (i32, i32) {
    %c0_i32 = arith.constant 0 : i32
    %c0_i32_0 = arith.constant 0 : i32
    %c0_i32_1 = arith.constant 0 : i32
    return %c0_i32, %c0_i32_0 : i32, i32
  }
  func.func @transform_9(%arg0: i32) -> (i32, i32) {
    %c0_i32 = arith.constant 0 : i32
    %c0_i32_0 = arith.constant 0 : i32
    %c0_i32_1 = arith.constant 0 : i32
    return %c0_i32, %c0_i32_0 : i32, i32
  }
  func.func @transform_10(%arg0: i32) -> (i32, i32) {
    %c0_i32 = arith.constant 0 : i32
    %c0_i32_0 = arith.constant 0 : i32
    %c0_i32_1 = arith.constant 0 : i32
    return %c0_i32, %c0_i32_0 : i32, i32
  }
  func.func @transform_11(%arg0: i32) -> (i32, i32) {
    %c0_i32 = arith.constant 0 : i32
    %c0_i32_0 = arith.constant 0 : i32
    return %arg0, %c0_i32 : i32, i32
  }
}

</mosaic_0001>

<llo_original>
// kernel: _forward.1
$region0: #{_forward.1}
  #allocation0 [shape = 'u32[]', space=smem, size = 0x4, offset = 0x4, fixed_abs, tag = 'smem constant byte address 0x4 - core index']
  #allocation1 [shape = 'u32[144,128]{1,0:T(1,128)}', space=vmem, size = 0x12000, scoped, tag = 'internal scratch']
  %s0 = inlined_call_operand.vmem [shape: f32[8,128], index: 0, kind: input, shape index: {}]
  %s1 = inlined_call_operand.hbm [shape: bf16[128,128], index: 1, kind: input, shape index: {}]
  %s2 = inlined_call_operand.vmem [shape: f32[1,128], index: 2, kind: input, shape index: {}]
  %s3 = inlined_call_operand.vmem [shape: f32[1,128], index: 3, kind: input, shape index: {}]
  %s4 = inlined_call_operand.vmem [shape: f32[1,128], index: 4, kind: input, shape index: {}]
  %s5 = inlined_call_operand.hbm [shape: bf16[128,128], index: 5, kind: input, shape index: {}]
  %s6 = inlined_call_operand.vmem [shape: f32[1,128], index: 6, kind: input, shape index: {}]
  %s7 = inlined_call_operand.vmem [shape: f32[1,128], index: 7, kind: input, shape index: {}]
  %s8 = inlined_call_operand.vmem [shape: f32[1,128], index: 8, kind: input, shape index: {}]
  %s9 = inlined_call_operand.hbm [shape: bf16[128,128], index: 9, kind: input, shape index: {}]
  %s10 = inlined_call_operand.vmem [shape: f32[1,128], index: 10, kind: input, shape index: {}]
  %s11 = inlined_call_operand.vmem [shape: f32[8,128], index: 11, kind: output, shape index: {}]
  %s12 = sld [smem:[#allocation0]]
  $region66: #{_forward.1} parent=0
    _
  %s14 = ssub.s32 1, %s12
  %s15 = scalar_select 0, %s14, %s12
  $region1: #{_forward.1} parent=0
    #allocation2 [shape = 'u8[32768]{0}', space=vmem, size = 0x8000, scoped, tag = 'input window, operand 1, single buffered']
    #allocation3 [shape = 's32[1]{0}', space=sflag, size = 0x4, scoped, tag = 'scoped memory for _forward.1']
    #allocation4 [shape = 'u8[32768]{0}', space=vmem, size = 0x8000, scoped, tag = 'input window, operand 5, single buffered']
    #allocation5 [shape = 's32[1]{0}', space=sflag, size = 0x4, scoped, tag = 'scoped memory for _forward.1']
    #allocation6 [shape = 'u8[32768]{0}', space=vmem, size = 0x8000, scoped, tag = 'input window, operand 9, single buffered']
    %16 = vsyncpa [#allocation3], 0
    %17 = vsyncpa [#allocation5], 0
    // Predicated region
    $region2: #{_forward.1} parent=1 // pred_check
      _
    $region3: #{_forward.1} parent=1 // pred_check_branch
      %19 = sbr.rel (0) target = $region5
    $region4: #{_forward.1} parent=1 // pred_region
      _
    $region5: #{_forward.1} parent=1 // pred_fallthru
      _
    // Predicated region
    $region6: #{_forward.1} parent=1 // pred_check
      _
    $region7: #{_forward.1} parent=1 // pred_check_branch
      %21 = sbr.rel (0) target = $region9
    $region8: #{_forward.1} parent=1 // pred_region
      %s23 = ssub.s32 1024, 1024
      %24 = vsyncadd [#allocation3], %s23
      %s25 = sshll.u32 [#allocation2], 4
      %s26 = int_to_ptr.vmem [resolvable:$true] %s25
      %31 = dma.hbm_to_vmem [thread:$0]  %s1, 1024, %s26, [#allocation3], 64, 64, 4
    $region9: #{_forward.1} parent=1 // pred_fallthru
      _
    // Predicated region
    $region10: #{_forward.1} parent=1 // pred_check
      _
    $region11: #{_forward.1} parent=1 // pred_check_branch
      %33 = sbr.rel (0) target = $region13
    $region12: #{_forward.1} parent=1 // pred_region
      _
    $region13: #{_forward.1} parent=1 // pred_fallthru
      _
    // Predicated region
    $region14: #{_forward.1} parent=1 // pred_check
      _
    $region15: #{_forward.1} parent=1 // pred_check_branch
      %35 = sbr.rel (0) target = $region17
    $region16: #{_forward.1} parent=1 // pred_region
      _
    $region17: #{_forward.1} parent=1 // pred_fallthru
      _
    // Predicated region
    $region18: #{_forward.1} parent=1 // pred_check
      _
    $region19: #{_forward.1} parent=1 // pred_check_branch
      %37 = sbr.rel (0) target = $region21
    $region20: #{_forward.1} parent=1 // pred_region
      _
    $region21: #{_forward.1} parent=1 // pred_fallthru
      _
    // Predicated region
    $region22: #{_forward.1} parent=1 // pred_check
      _
    $region23: #{_forward.1} parent=1 // pred_check_branch
      %39 = sbr.rel (0) target = $region25
    $region24: #{_forward.1} parent=1 // pred_region
      %s41 = ssub.s32 1024, 1024
      %42 = vsyncadd [#allocation5], %s41
      %s43 = sshll.u32 [#allocation4], 4
      %s44 = int_to_ptr.vmem [resolvable:$true] %s43
      %49 = dma.hbm_to_vmem [thread:$0]  %s5, 1024, %s44, [#allocation5], 64, 64, 4
    $region25: #{_forward.1} parent=1 // pred_fallthru
      _
    // Predicated region
    $region26: #{_forward.1} parent=1 // pred_check
      _
    $region27: #{_forward.1} parent=1 // pred_check_branch
      %51 = sbr.rel (0) target = $region29
    $region28: #{_forward.1} parent=1 // pred_region
      _
    $region29: #{_forward.1} parent=1 // pred_fallthru
      _
    // Predicated region
    $region30: #{_forward.1} parent=1 // pred_check
      _
    $region31: #{_forward.1} parent=1 // pred_check_branch
      %53 = sbr.rel (0) target = $region33
    $region32: #{_forward.1} parent=1 // pred_region
      _
    $region33: #{_forward.1} parent=1 // pred_fallthru
      _
    // Predicated region
    $region34: #{_forward.1} parent=1 // pred_check
      _
    $region35: #{_forward.1} parent=1 // pred_check_branch
      %55 = sbr.rel (0) target = $region37
    $region36: #{_forward.1} parent=1 // pred_region
      _
    $region37: #{_forward.1} parent=1 // pred_fallthru
      _
    // Predicated region
    $region38: #{_forward.1} parent=1 // pred_check
      _
    $region39: #{_forward.1} parent=1 // pred_check_branch
      %57 = sbr.rel (0) target = $region41
    $region40: #{_forward.1} parent=1 // pred_region
      %s59 = ssub.s32 1024, 1024
      %60 = vsyncadd [#allocation5], %s59
      %s61 = sshll.u32 [#allocation6], 4
      %s62 = int_to_ptr.vmem [resolvable:$true] %s61
      %67 = dma.hbm_to_vmem [thread:$0]  %s9, 1024, %s62, [#allocation5], 64, 64, 4
    $region41: #{_forward.1} parent=1 // pred_fallthru
      _
    // Predicated region
    $region42: #{_forward.1} parent=1 // pred_check
      _
    $region43: #{_forward.1} parent=1 // pred_check_branch
      %69 = sbr.rel (0) target = $region45
    $region44: #{_forward.1} parent=1 // pred_region
      _
    $region45: #{_forward.1} parent=1 // pred_fallthru
      _
    // Predicated region
    $region46: #{_forward.1} parent=1 // pred_check
      _
    $region47: #{_forward.1} parent=1 // pred_check_branch
      %71 = sbr.rel (0) target = $region49
    $region48: #{_forward.1} parent=1 // pred_region
      %72 = dma.done [#allocation3], 1024
    $region49: #{_forward.1} parent=1 // pred_fallthru
      _
    // Predicated region
    $region50: #{_forward.1} parent=1 // pred_check
      _
    $region51: #{_forward.1} parent=1 // pred_check_branch
      %74 = sbr.rel (0) target = $region53
    $region52: #{_forward.1} parent=1 // pred_region
      %75 = dma.done [#allocation5], 1024
    $region53: #{_forward.1} parent=1 // pred_fallthru
      _
    // Predicated region
    $region54: #{_forward.1} parent=1 // pred_check
      _
    $region55: #{_forward.1} parent=1 // pred_check_branch
      %77 = sbr.rel (0) target = $region57
    $region56: #{_forward.1} parent=1 // pred_region
      %78 = dma.done [#allocation5], 1024
    $region57: #{_forward.1} parent=1 // pred_fallthru
      _
    %v80 = vld [vmem:[%s0] sm:$0xff]
    %v81 = vld [vmem:[#allocation2] sm:$0xf]
    %v82 = vld [vmem:[#allocation2 + $0x4] sm:$0xf]
    %v83 = vld [vmem:[#allocation2 + $0x8] sm:$0xf]
    %v84 = vld [vmem:[#allocation2 + $0xc] sm:$0xf]
    %v85 = vld [vmem:[#allocation2 + $0x10] sm:$0xf]
    %v86 = vld [vmem:[#allocation2 + $0x14] sm:$0xf]
    %v87 = vld [vmem:[#allocation2 + $0x18] sm:$0xf]
    %v88 = vld [vmem:[#allocation2 + $0x1c] sm:$0xf]
    %v89 = vld [vmem:[#allocation2 + $0x20] sm:$0xf]
    %v90 = vld [vmem:[#allocation2 + $0x24] sm:$0xf]
    %v91 = vld [vmem:[#allocation2 + $0x28] sm:$0xf]
    %v92 = vld [vmem:[#allocation2 + $0x2c] sm:$0xf]
    %v93 = vld [vmem:[#allocation2 + $0x30] sm:$0xf]
    %v94 = vld [vmem:[#allocation2 + $0x34] sm:$0xf]
    %v95 = vld [vmem:[#allocation2 + $0x38] sm:$0xf]
    %v96 = vld [vmem:[#allocation2 + $0x3c] sm:$0xf]
    %v97 = vld [vmem:[%s2] sm:$0x1]
    %v98 = vld [vmem:[%s3] sm:$0x1]
    %v99 = vld [vmem:[%s4] sm:$0x1]
    %v100 = vpack.c.bf16 %v80, %v80
    %v102 = vlaneseq
    %v103 = vshrl.u32 %v102, 7
    %v104 = vsub.s32 0, %v103
    %v105 = vrot.slane %v97, %v104
    %v123 = vunpack.c.l.b16 %v81
    %v124 = vunpack.c.l.b16 %v82
    %v125 = vunpack.c.l.b16 %v83
    %v126 = vunpack.c.l.b16 %v84
    %v127 = vunpack.c.l.b16 %v85
    %v128 = vunpack.c.l.b16 %v86
    %v129 = vunpack.c.l.b16 %v87
    %v130 = vunpack.c.l.b16 %v88
    %v131 = vunpack.c.l.b16 %v89
    %v132 = vunpack.c.l.b16 %v90
    %v133 = vunpack.c.l.b16 %v91
    %v134 = vunpack.c.l.b16 %v92
    %v135 = vunpack.c.l.b16 %v93
    %v136 = vunpack.c.l.b16 %v94
    %v137 = vunpack.c.l.b16 %v95
    %v138 = vunpack.c.l.b16 %v96
    %v139 = vpack.c.b16 %v124, %v123
    %v140 = vpack.c.b16 %v126, %v125
    %v141 = vpack.c.b16 %v128, %v127
    %v142 = vpack.c.b16 %v130, %v129
    %v143 = vpack.c.b16 %v132, %v131
    %v144 = vpack.c.b16 %v134, %v133
    %v145 = vpack.c.b16 %v136, %v135
    %v146 = vpack.c.b16 %v138, %v137
    %155 = vmatprep.subr.bf16.mxu0 0
    %156 = vmatpush1.bf16.msra.mxu0 %v139
    %157 = vmatprep.subr.bf16.mxu0 0
    %158 = vmatpush1.bf16.msra.mxu0 %v140
    %159 = vmatprep.subr.bf16.mxu0 0
    %160 = vmatpush1.bf16.msra.mxu0 %v141
    %161 = vmatprep.subr.bf16.mxu0 0
    %162 = vmatpush1.bf16.msra.mxu0 %v142
    %163 = vmatprep.subr.bf16.mxu0 0
    %164 = vmatpush1.bf16.msra.mxu0 %v143
    %165 = vmatprep.subr.bf16.mxu0 0
    %166 = vmatpush1.bf16.msra.mxu0 %v144
    %167 = vmatprep.subr.bf16.mxu0 0
    %168 = vmatpush1.bf16.msra.mxu0 %v145
    %169 = vmatprep.subr.bf16.mxu0 0
    %170 = vmatpush1.bf16.msra.mxu0 %v146
    %171 = vmatprep.subr.bf16.mxu0 0
    %172 = vmatpush1.bf16.msra.mxu0 0
    %173 = vmatprep.subr.bf16.mxu0 0
    %174 = vmatpush1.bf16.msra.mxu0 0
    %175 = vmatprep.subr.bf16.mxu0 0
    %176 = vmatpush1.bf16.msra.mxu0 0
    %177 = vmatprep.subr.bf16.mxu0 0
    %178 = vmatpush1.bf16.msra.mxu0 0
    %179 = vmatprep.subr.bf16.mxu0 0
    %180 = vmatpush1.bf16.msra.mxu0 0
    %181 = vmatprep.subr.bf16.mxu0 0
    %182 = vmatpush1.bf16.msra.mxu0 0
    %183 = vmatprep.subr.bf16.mxu0 0
    %184 = vmatpush1.bf16.msra.mxu0 0
    %185 = vmatprep.subr.bf16.mxu0 0
    %186 = vmatpush1.bf16.msra.mxu0 0
    %187 = vmatprep.mubr.bf16.mxu0 0
    %188 = vmatmul.mubr.bf16.gmra.mrb[0].mxu0 %v100
    %v189 = vpop.f32.mrb[0].mxu0
    %v190 = vadd.f32 %v105, %v189
    %v191 = vpop.f32.mrb[0].mxu0
    %v192 = vpop.f32.mrb[0].mxu0
    %v193 = vpop.f32.mrb[0].mxu0
    %194 = vdwg.mxu0
    %195 = vadd.xlane.f32.xlu0 %v190
    %v196 = vpop.xlane.xlu0 %195
    %v197 = vmul.f32 %v196, 0.03125
    %v198 = vmul.f32 %v190, %v190
    %199 = vadd.xlane.f32.xlu0 %v198
    %v200 = vpop.xlane.xlu0 %199
    %v201 = vmul.f32 %v200, 0.03125
    %v202 = vmul.f32 %v197, %v197
    %v203 = vsub.f32 %v201, %v202
    %v204 = vmax.f32 %v203, 0.0
    %v205 = vsub.f32 %v190, %v197
    %v206 = vadd.f32 %v204, 1e-05
    %v207 = vrsqrt.pop %v206
    %v208 = vmul.f32 %v205, %v207
    %v210 = vlaneseq
    %v211 = vshrl.u32 %v210, 7
    %v212 = vsub.s32 0, %v211
    %v213 = vrot.slane %v98, %v212
    %v215 = vmul.f32 %v208, %v213
    %v217 = vlaneseq
    %v218 = vshrl.u32 %v217, 7
    %v219 = vsub.s32 0, %v218
    %v220 = vrot.slane %v99, %v219
    %v222 = vadd.f32 %v215, %v220
    %v223 = vmax.f32 %v222, 0.0
    %v224 = vld [vmem:[#allocation4] sm:$0xf]
    %v225 = vld [vmem:[#allocation4 + $0x4] sm:$0xf]
    %v226 = vld [vmem:[#allocation4 + $0x8] sm:$0xf]
    %v227 = vld [vmem:[#allocation4 + $0xc] sm:$0xf]
    %v228 = vld [vmem:[#allocation4 + $0x10] sm:$0xf]
    %v229 = vld [vmem:[#allocation4 + $0x14] sm:$0xf]
    %v230 = vld [vmem:[#allocation4 + $0x18] sm:$0xf]
    %v231 = vld [vmem:[#allocation4 + $0x1c] sm:$0xf]
    %v232 = vld [vmem:[#allocation4 + $0x20] sm:$0xf]
    %v233 = vld [vmem:[#allocation4 + $0x24] sm:$0xf]
    %v234 = vld [vmem:[#allocation4 + $0x28] sm:$0xf]
    %v235 = vld [vmem:[#allocation4 + $0x2c] sm:$0xf]
    %v236 = vld [vmem:[#allocation4 + $0x30] sm:$0xf]
    %v237 = vld [vmem:[#allocation4 + $0x34] sm:$0xf]
    %v238 = vld [vmem:[#allocation4 + $0x38] sm:$0xf]
    %v239 = vld [vmem:[#allocation4 + $0x3c] sm:$0xf]
    %v240 = vld [vmem:[%s6] sm:$0x1]
    %v241 = vld [vmem:[%s7] sm:$0x1]
    %v242 = vld [vmem:[%s8] sm:$0x1]
    %v243 = vpack.c.bf16 %v223, %v223
    %v245 = vlaneseq
    %v246 = vshrl.u32 %v245, 7
    %v247 = vsub.s32 0, %v246
    %v248 = vrot.slane %v240, %v247
    %v266 = vunpack.c.l.b16 %v224
    %v267 = vunpack.c.l.b16 %v225
    %v268 = vunpack.c.l.b16 %v226
    %v269 = vunpack.c.l.b16 %v227
    %v270 = vunpack.c.l.b16 %v228
    %v271 = vunpack.c.l.b16 %v229
    %v272 = vunpack.c.l.b16 %v230
    %v273 = vunpack.c.l.b16 %v231
    %v274 = vunpack.c.l.b16 %v232
    %v275 = vunpack.c.l.b16 %v233
    %v276 = vunpack.c.l.b16 %v234
    %v277 = vunpack.c.l.b16 %v235
    %v278 = vunpack.c.l.b16 %v236
    %v279 = vunpack.c.l.b16 %v237
    %v280 = vunpack.c.l.b16 %v238
    %v281 = vunpack.c.l.b16 %v239
    %v282 = vpack.c.b16 %v267, %v266
    %v283 = vpack.c.b16 %v269, %v268
    %v284 = vpack.c.b16 %v271, %v270
    %v285 = vpack.c.b16 %v273, %v272
    %v286 = vpack.c.b16 %v275, %v274
    %v287 = vpack.c.b16 %v277, %v276
    %v288 = vpack.c.b16 %v279, %v278
    %v289 = vpack.c.b16 %v281, %v280
    %298 = vmatprep.subr.bf16.mxu0 0
    %299 = vmatpush1.bf16.msra.mxu0 %v282
    %300 = vmatprep.subr.bf16.mxu0 0
    %301 = vmatpush1.bf16.msra.mxu0 %v283
    %302 = vmatprep.subr.bf16.mxu0 0
    %303 = vmatpush1.bf16.msra.mxu0 %v284
    %304 = vmatprep.subr.bf16.mxu0 0
    %305 = vmatpush1.bf16.msra.mxu0 %v285
    %306 = vmatprep.subr.bf16.mxu0 0
    %307 = vmatpush1.bf16.msra.mxu0 %v286
    %308 = vmatprep.subr.bf16.mxu0 0
    %309 = vmatpush1.bf16.msra.mxu0 %v287
    %310 = vmatprep.subr.bf16.mxu0 0
    %311 = vmatpush1.bf16.msra.mxu0 %v288
    %312 = vmatprep.subr.bf16.mxu0 0
    %313 = vmatpush1.bf16.msra.mxu0 %v289
    %314 = vmatprep.subr.bf16.mxu0 0
    %315 = vmatpush1.bf16.msra.mxu0 0
    %316 = vmatprep.subr.bf16.mxu0 0
    %317 = vmatpush1.bf16.msra.mxu0 0
    %318 = vmatprep.subr.bf16.mxu0 0
    %319 = vmatpush1.bf16.msra.mxu0 0
    %320 = vmatprep.subr.bf16.mxu0 0
    %321 = vmatpush1.bf16.msra.mxu0 0
    %322 = vmatprep.subr.bf16.mxu0 0
    %323 = vmatpush1.bf16.msra.mxu0 0
    %324 = vmatprep.subr.bf16.mxu0 0
    %325 = vmatpush1.bf16.msra.mxu0 0
    %326 = vmatprep.subr.bf16.mxu0 0
    %327 = vmatpush1.bf16.msra.mxu0 0
    %328 = vmatprep.subr.bf16.mxu0 0
    %329 = vmatpush1.bf16.msra.mxu0 0
    %330 = vmatprep.mubr.bf16.mxu0 0
    %331 = vmatmul.mubr.bf16.gmra.mrb[0].mxu0 %v243
    %v332 = vpop.f32.mrb[0].mxu0
    %v333 = vadd.f32 %v248, %v332
    %v334 = vpop.f32.mrb[0].mxu0
    %v335 = vpop.f32.mrb[0].mxu0
    %v336 = vpop.f32.mrb[0].mxu0
    %337 = vdwg.mxu0
    %338 = vadd.xlane.f32.xlu0 %v333
    %v339 = vpop.xlane.xlu0 %338
    %v340 = vmul.f32 %v339, 0.03125
    %v341 = vmul.f32 %v333, %v333
    %342 = vadd.xlane.f32.xlu0 %v341
    %v343 = vpop.xlane.xlu0 %342
    %v344 = vmul.f32 %v343, 0.03125
    %v345 = vmul.f32 %v340, %v340
    %v346 = vsub.f32 %v344, %v345
    %v347 = vmax.f32 %v346, 0.0
    %v348 = vsub.f32 %v333, %v340
    %v349 = vadd.f32 %v347, 1e-05
    %v350 = vrsqrt.pop %v349
    %v351 = vmul.f32 %v348, %v350
    %v353 = vlaneseq
    %v354 = vshrl.u32 %v353, 7
    %v355 = vsub.s32 0, %v354
    %v356 = vrot.slane %v241, %v355
    %v358 = vmul.f32 %v351, %v356
    %v360 = vlaneseq
    %v361 = vshrl.u32 %v360, 7
    %v362 = vsub.s32 0, %v361
    %v363 = vrot.slane %v242, %v362
    %v365 = vadd.f32 %v358, %v363
    %v366 = vmax.f32 %v365, 0.0
    %v367 = vld [vmem:[#allocation6] sm:$0xf]
    %v368 = vld [vmem:[#allocation6 + $0x4] sm:$0xf]
    %v369 = vld [vmem:[#allocation6 + $0x8] sm:$0xf]
    %v370 = vld [vmem:[#allocation6 + $0xc] sm:$0xf]
    %v371 = vld [vmem:[#allocation6 + $0x10] sm:$0xf]
    %v372 = vld [vmem:[#allocation6 + $0x14] sm:$0xf]
    %v373 = vld [vmem:[#allocation6 + $0x18] sm:$0xf]
    %v374 = vld [vmem:[#allocation6 + $0x1c] sm:$0xf]
    %v375 = vld [vmem:[#allocation6 + $0x20] sm:$0xf]
    %v376 = vld [vmem:[#allocation6 + $0x24] sm:$0xf]
    %v377 = vld [vmem:[#allocation6 + $0x28] sm:$0xf]
    %v378 = vld [vmem:[#allocation6 + $0x2c] sm:$0xf]
    %v379 = vld [vmem:[#allocation6 + $0x30] sm:$0xf]
    %v380 = vld [vmem:[#allocation6 + $0x34] sm:$0xf]
    %v381 = vld [vmem:[#allocation6 + $0x38] sm:$0xf]
    %v382 = vld [vmem:[#allocation6 + $0x3c] sm:$0xf]
    %v383 = vld [vmem:[%s10] sm:$0x1]
    %v384 = vpack.c.bf16 %v366, %v366
    %v386 = vlaneseq
    %v387 = vshrl.u32 %v386, 7
    %v388 = vsub.s32 0, %v387
    %v389 = vrot.slane %v383, %v388
    %v407 = vunpack.c.l.b16 %v367
    %v408 = vunpack.c.l.b16 %v368
    %v409 = vunpack.c.l.b16 %v369
    %v410 = vunpack.c.l.b16 %v370
    %v411 = vunpack.c.l.b16 %v371
    %v412 = vunpack.c.l.b16 %v372
    %v413 = vunpack.c.l.b16 %v373
    %v414 = vunpack.c.l.b16 %v374
    %v415 = vunpack.c.l.b16 %v375
    %v416 = vunpack.c.l.b16 %v376
    %v417 = vunpack.c.l.b16 %v377
    %v418 = vunpack.c.l.b16 %v378
    %v419 = vunpack.c.l.b16 %v379
    %v420 = vunpack.c.l.b16 %v380
    %v421 = vunpack.c.l.b16 %v381
    %v422 = vunpack.c.l.b16 %v382
    %v423 = vpack.c.b16 %v408, %v407
    %v424 = vpack.c.b16 %v410, %v409
    %v425 = vpack.c.b16 %v412, %v411
    %v426 = vpack.c.b16 %v414, %v413
    %v427 = vpack.c.b16 %v416, %v415
    %v428 = vpack.c.b16 %v418, %v417
    %v429 = vpack.c.b16 %v420, %v419
    %v430 = vpack.c.b16 %v422, %v421
    %439 = vmatprep.subr.bf16.mxu0 0
    %440 = vmatpush1.bf16.msra.mxu0 %v423
    %441 = vmatprep.subr.bf16.mxu0 0
    %442 = vmatpush1.bf16.msra.mxu0 %v424
    %443 = vmatprep.subr.bf16.mxu0 0
    %444 = vmatpush1.bf16.msra.mxu0 %v425
    %445 = vmatprep.subr.bf16.mxu0 0
    %446 = vmatpush1.bf16.msra.mxu0 %v426
    %447 = vmatprep.subr.bf16.mxu0 0
    %448 = vmatpush1.bf16.msra.mxu0 %v427
    %449 = vmatprep.subr.bf16.mxu0 0
    %450 = vmatpush1.bf16.msra.mxu0 %v428
    %451 = vmatprep.subr.bf16.mxu0 0
    %452 = vmatpush1.bf16.msra.mxu0 %v429
    %453 = vmatprep.subr.bf16.mxu0 0
    %454 = vmatpush1.bf16.msra.mxu0 %v430
    %455 = vmatprep.subr.bf16.mxu0 0
    %456 = vmatpush1.bf16.msra.mxu0 0
    %457 = vmatprep.subr.bf16.mxu0 0
    %458 = vmatpush1.bf16.msra.mxu0 0
    %459 = vmatprep.subr.bf16.mxu0 0
    %460 = vmatpush1.bf16.msra.mxu0 0
    %461 = vmatprep.subr.bf16.mxu0 0
    %462 = vmatpush1.bf16.msra.mxu0 0
    %463 = vmatprep.subr.bf16.mxu0 0
    %464 = vmatpush1.bf16.msra.mxu0 0
    %465 = vmatprep.subr.bf16.mxu0 0
    %466 = vmatpush1.bf16.msra.mxu0 0
    %467 = vmatprep.subr.bf16.mxu0 0
    %468 = vmatpush1.bf16.msra.mxu0 0
    %469 = vmatprep.subr.bf16.mxu0 0
    %470 = vmatpush1.bf16.msra.mxu0 0
    %471 = vmatprep.mubr.bf16.mxu0 0
    %472 = vmatmul.mubr.bf16.gmra.mrb[0].mxu0 %v384
    %v473 = vpop.f32.mrb[0].mxu0
    %v474 = vadd.f32 %v389, %v473
    %v475 = vpop.f32.mrb[0].mxu0
    %v476 = vpop.f32.mrb[0].mxu0
    %v477 = vpop.f32.mrb[0].mxu0
    %478 = vdwg.mxu0
    %479 = vst [vmem:[%s11] sm:$0xff] %v474
    // Predicated region
    $region58: #{_forward.1} parent=1 // pred_check
      _
    $region59: #{_forward.1} parent=1 // pred_check_branch
      %481 = sbr.rel (0) target = $region61
    $region60: #{_forward.1} parent=1 // pred_region
      _
    $region61: #{_forward.1} parent=1 // pred_fallthru
      _
    // Predicated region
    $region62: #{_forward.1} parent=1 // pred_check
      _
    $region63: #{_forward.1} parent=1 // pred_check_branch
      %483 = sbr.rel (0) target = $region65
    $region64: #{_forward.1} parent=1 // pred_region
      _
    $region65: #{_forward.1} parent=1 // pred_fallthru
      _
    %484 = vsyncpa [#allocation3], 1
    %485 = vsyncpa [#allocation5], 1

</llo_original>
